<compile_context>
chip_gen: v7x
topology: tpu7x:2x2x1
jax: 0.10.0
libtpu: 0.0.40
codegen_flags: <defaults>
</compile_context>

<pallas_src>
import jax
import jax.numpy as jnp
import numpy as np
from jax.experimental import pallas as pl
from jax.experimental.pallas import tpu as pltpu


# ----------------------------- wrapper-side constants -----------------------------

def _round_up(x, m):
    return (x + m - 1) // m * m


def _interp_matrix_align_corners(n_in, n_out):
    """1-D bilinear interpolation matrix, align_corners=True (PyTorch semantics)."""
    if n_in == 1:
        return jnp.ones((n_out, 1), jnp.float32)
    src = jnp.arange(n_out, dtype=jnp.float32) * (n_in - 1) / (n_out - 1)
    i0 = jnp.clip(jnp.floor(src).astype(jnp.int32), 0, n_in - 2)
    frac = src - i0.astype(jnp.float32)
    rows = jnp.arange(n_out)
    m = jnp.zeros((n_out, n_in), jnp.float32)
    m = m.at[rows, i0].add(1.0 - frac)
    m = m.at[rows, i0 + 1].add(frac)
    return m


def _upsample_pad_matrix(H1, W1, H2, W2):
    """(H1*W1, H2*W2) matrix: flat image -> bilinear-2x-upsampled + F.pad'ed flat image."""
    Ho, Wo = 2 * H1, 2 * W1
    R = _interp_matrix_align_corners(H1, Ho)      # (Ho, H1)
    Cm = _interp_matrix_align_corners(W1, Wo)     # (Wo, W1)
    M = R[:, None, :, None] * Cm[None, :, None, :]            # (Ho, Wo, H1, W1)
    dY, dX = H2 - Ho, W2 - Wo
    M = jnp.pad(M, ((dY // 2, dY - dY // 2), (dX // 2, dX - dX // 2), (0, 0), (0, 0)))
    return jnp.transpose(M, (2, 3, 0, 1)).reshape(H1 * W1, H2 * W2)


def _tap_masks(N, H, W):
    """(9, N*H*W) 0/1 mask: is 3x3 tap t in-bounds (within the same image) at flat pixel?"""
    m = np.zeros((9, N * H * W), np.float32)
    for t in range(9):
        dy, dx = t // 3 - 1, t % 3 - 1
        for n in range(N):
            for i in range(H):
                if not (0 <= i + dy < H):
                    continue
                for j in range(W):
                    if 0 <= j + dx < W:
                        m[t, (n * H + i) * W + j] = 1.0
    return jnp.asarray(m)


# ----------------------------- fused Pallas kernel -----------------------------

def up_triple_forward(x1_nchw, x2_nchw, conv_params):
    """UpTriple.forward (kernel_size=3, bilinear=True) as one fused Pallas call.

    conv_params: list of 3 tuples (w[3,3,Cin,Cout] HWIO, bn_scale[Cout], bn_shift[Cout]);
                 each block is Conv(3x3, pad=1, no bias) -> ReLU -> BN (folded affine).
    """
    N, Cin, H1, W1 = x1_nchw.shape
    N2, Cskip, H2, W2 = x2_nchw.shape
    assert N2 == N
    HW, NHW = H1 * W1, N * H1 * W1
    n_layers = len(conv_params)
    cins = [int(p[0].shape[2]) for p in conv_params]
    couts = [int(p[0].shape[3]) for p in conv_params]
    assert cins[0] == Cin
    cmid = couts[-1]
    out_c = Cskip + cmid
    CP = _round_up(max(cins + couts), 8)          # conv channels padded to a sublane tile
    OCP = _round_up(out_c, 8)                     # output-tile row padding
    K2 = 9 * CP
    offs = [(t // 3 - 1) * W1 + (t % 3 - 1) for t in range(9)]   # static flat tap offsets
    # Fast path: skip rows + conv rows fill one padded tile exactly -> sublane roll + add
    # assembles the full per-image output tile, stored unmasked in one go.
    full_tile_out = (OCP == CP) and (Cskip + cmid == CP)

    # ---- parameter packing: ONE slab (n_layers, CP, 9*CP + 2); padded entries are 0 ----
    slabs = []
    for (w, scale, shift) in conv_params:
        ci, co = int(w.shape[2]), int(w.shape[3])
        w_p = jnp.pad(w.astype(jnp.float32), ((0, 0), (0, 0), (0, CP - ci), (0, CP - co)))
        wcat = jnp.transpose(w_p, (3, 0, 1, 2)).reshape(CP, K2)   # col = (ky*3+kx)*CP + ci
        s_p = jnp.pad(scale.astype(jnp.float32), (0, CP - co)).reshape(CP, 1)
        b_p = jnp.pad(shift.astype(jnp.float32), (0, CP - co)).reshape(CP, 1)
        slabs.append(jnp.concatenate([wcat, s_p, b_p], axis=1))
    params = jnp.stack(slabs, axis=0)                             # (L, CP, K2 + 2)

    # ---- input packing: channels padded to a full sublane tile; images along lanes ----
    x1p = jnp.pad(
        jnp.transpose(x1_nchw.reshape(N, Cin, HW), (1, 0, 2)).reshape(Cin, NHW),
        ((0, CP - Cin), (0, 0))).astype(jnp.float32)              # (CP, N*HW)
    x2p = jnp.pad(x2_nchw.reshape(N, Cskip, H2 * W2),
                  ((0, 0), (0, OCP - Cskip), (0, 0))).astype(jnp.float32)  # (N, OCP, H2*W2)
    masks = _tap_masks(N, H1, W1)                                 # (9, N*HW)
    mt = _upsample_pad_matrix(H1, W1, H2, W2)                     # (HW, H2*W2)

    def kernel(x1_ref, x2_ref, masks_ref, mt_ref, p_ref, out_ref):
        m_all = masks_ref[...]
        tap_ok = [m_all[t:t + 1, :] != 0.0 for t in range(9)]     # (1, NHW) bool each

        h = x1_ref[...]                                           # (CP, NHW), full-tile load
        for l in range(n_layers):
            p_l = p_ref[l]                                        # (CP, K2 + 2)
            w = p_l[:, 0:K2]
            scale = p_l[:, K2:K2 + 1]
            shift = p_l[:, K2 + 1:K2 + 2]
            # Register-resident im2col: 9 lane-rolls of the live feature map; invalid
            # (out-of-image / cross-image) lanes zeroed via where (NaN/Inf safe).
            taps = []
            for t in range(9):
                if offs[t] == 0:
                    taps.append(h)                                # center tap: mask is all 1
                else:
                    rolled = pltpu.roll(h, shift=(-offs[t]) % NHW, axis=1)
                    taps.append(jnp.where(tap_ok[t], rolled, 0.0))
            xt = jnp.concatenate(taps, axis=0)                    # (9*CP, NHW), tile-aligned
            # ONE lane-dense MXU GEMM per conv layer; then ReLU; then folded BN affine.
            acc = jnp.dot(w, xt, preferred_element_type=jnp.float32)
            h = jnp.maximum(acc, 0.0) * scale + shift             # padded rows stay exactly 0

        # Fused upsample + F.pad: one (N*CP, HW) @ (HW, H2*W2) GEMM for all images.
        h_stack = jnp.concatenate([h[:, n * HW:(n + 1) * HW] for n in range(N)], axis=0)
        up_all = jnp.dot(h_stack, mt_ref[...], preferred_element_type=jnp.float32)

        if full_tile_out:
            # Concat = skip rows [0:Cskip] + conv rows rolled to [Cskip:CP] (padded rows
            # of up_all are exactly zero), then a single unmasked full-tile store.
            tiles = []
            for n in range(N):
                up_n = up_all[n * CP:(n + 1) * CP, :]
                up_sh = up_n if Cskip == 0 else pltpu.roll(up_n, shift=Cskip, axis=0)
                tiles.append(x2_ref[n] + up_sh)
            out_ref[...] = jnp.stack(tiles, axis=0).astype(out_ref.dtype)
        else:
            for n in range(N):
                out_ref[n, 0:Cskip, :] = x2_ref[n][0:Cskip, :].astype(out_ref.dtype)
                out_ref[n, Cskip:Cskip + cmid, :] = (
                    up_all[n * CP:n * CP + cmid, :].astype(out_ref.dtype))

    out_flat = pl.pallas_call(
        kernel,
        out_shape=jax.ShapeDtypeStruct((N, out_c, H2 * W2), x1_nchw.dtype),
    )(x1p, x2p, masks, mt, params)

    return out_flat.reshape(N, out_c, H2, W2)


# ----------------------------- pure-JAX reference -----------------------------

def up_triple_reference(x1, x2, conv_params):
    h = x1
    for w, scale, shift in conv_params:
        h = jax.lax.conv_general_dilated(
            h, w, window_strides=(1, 1), padding=((1, 1), (1, 1)),
            dimension_numbers=("NCHW", "HWIO", "NCHW"),
            precision=jax.lax.Precision.HIGHEST)
        h = jnp.maximum(h, 0.0)
        h = h * scale[None, :, None, None] + shift[None, :, None, None]
    _, _, H, W = h.shape
    R = _interp_matrix_align_corners(H, 2 * H)
    Cm = _interp_matrix_align_corners(W, 2 * W)
    h = jnp.einsum("nchw,yh,xw->ncyx", h, R, Cm,
                   precision=jax.lax.Precision.HIGHEST)
    dY = x2.shape[2] - h.shape[2]
    dX = x2.shape[3] - h.shape[3]
    h = jnp.pad(h, ((0, 0), (0, 0), (dY // 2, dY - dY // 2), (dX // 2, dX - dX // 2)))
    return jnp.concatenate([x2, h], axis=1)


# ----------------------------- main -----------------------------

if __name__ == "__main__":
    key = jax.random.PRNGKey(0)

    # UpTriple(in_channels=4, out_channels=8, kernel_size=3, bilinear=True)
    #   -> conv = TripleConv3(4, 4) (mid = 4), up = bilinear x2
    in_channels = 4
    out_channels = 8
    mid = out_channels // 2           # 4

    N, H1, W1 = 2, 8, 8               # x1: low-res feature map
    H2, W2 = 16, 16                   # x2: skip connection (2x spatial)

    k_x1, k_x2, k_p = jax.random.split(key, 3)
    x1 = jax.random.normal(k_x1, (N, in_channels, H1, W1), jnp.float32)   # NCHW
    x2 = jax.random.normal(k_x2, (N, mid, H2, W2), jnp.float32)           # NCHW

    def make_block(k, cin, cout):
        kw, kg, kb, km, kv = jax.random.split(k, 5)
        w = 0.1 * jax.random.normal(kw, (3, 3, cin, cout), jnp.float32)   # HWIO
        gamma = 1.0 + 0.1 * jax.random.normal(kg, (cout,), jnp.float32)
        beta = 0.1 * jax.random.normal(kb, (cout,), jnp.float32)
        mean = 0.1 * jax.random.normal(km, (cout,), jnp.float32)
        var = jnp.abs(jax.random.normal(kv, (cout,), jnp.float32)) + 0.5
        scale = gamma / jnp.sqrt(var + 1e-5)
        shift = beta - mean * scale
        return (w, scale, shift)

    kp1, kp2, kp3 = jax.random.split(k_p, 3)
    conv_params = [
        make_block(kp1, in_channels, mid),
        make_block(kp2, mid, mid),
        make_block(kp3, mid, mid),
    ]

    out = jax.jit(up_triple_forward)(x1, x2, conv_params)
    out = jax.block_until_ready(out)

    expected_shape = (N, mid + mid, H2, W2)     # (2, 8, 16, 16)
    assert out.shape == expected_shape, out.shape
    assert bool(jnp.all(jnp.isfinite(out)))

    ref = jax.block_until_ready(jax.jit(up_triple_reference)(x1, x2, conv_params))
    max_err = float(jnp.max(jnp.abs(out - ref)))
    assert max_err < 2e-2, f"max abs err vs reference: {max_err}"

    print("KERNEL_OK")
</pallas_src>

<mosaic_0001>
module attributes {stable_mosaic.version = 11 : i64} {
  func.func private @main(%arg0: i32) attributes {dimension_semantics = [#tpu.dimension_semantics<core_parallel>], iteration_bounds = array<i64: 2>, tpu.core_type = #tpu.core_type<sc_scalar_subcore>, window_params = []} {
    return
  }
}

module attributes {stable_mosaic.version = 11 : i64} {
  func.func private @main(%arg0: i32) attributes {dimension_semantics = [#tpu.dimension_semantics<core_parallel>], iteration_bounds = array<i64: 2>, tpu.core_type = #tpu.core_type<sc_scalar_subcore>, window_params = []} {
    return
  }
}

module attributes {stable_mosaic.version = 11 : i64} {
  func.func @kernel(%arg0: memref<8x128xf32, #tpu.memory_space<vmem>>, %arg1: memref<2x8x256xf32, #tpu.memory_space<vmem>>, %arg2: memref<9x128xf32, #tpu.memory_space<vmem>>, %arg3: memref<64x256xf32, #tpu.memory_space<vmem>>, %arg4: memref<3x8x74xf32, #tpu.memory_space<vmem>>, %arg5: memref<2x8x256xf32, #tpu.memory_space<vmem>>) attributes {dimension_semantics = [], scalar_prefetch = 0 : i64, scratch_operands = 0 : i64, tpu.core_type = #tpu.core_type<tc>} {
    %c0 = arith.constant 0 : index
    %c0_0 = arith.constant 0 : index
    %0 = vector.load %arg2[%c0, %c0_0] : memref<9x128xf32, #tpu.memory_space<vmem>>, vector<9x128xf32>
    %1 = vector.extract_strided_slice %0 {offsets = [0, 0], sizes = [1, 128], strides = [1, 1]} : vector<9x128xf32> to vector<1x128xf32>
    %cst = arith.constant 0.000000e+00 : f32
    %2 = vector.broadcast %cst : f32 to vector<1x128xf32>
    %3 = arith.cmpf one, %1, %2 : vector<1x128xf32>
    %4 = vector.extract_strided_slice %0 {offsets = [1, 0], sizes = [1, 128], strides = [1, 1]} : vector<9x128xf32> to vector<1x128xf32>
    %cst_1 = arith.constant 0.000000e+00 : f32
    %5 = vector.broadcast %cst_1 : f32 to vector<1x128xf32>
    %6 = arith.cmpf one, %4, %5 : vector<1x128xf32>
    %7 = vector.extract_strided_slice %0 {offsets = [2, 0], sizes = [1, 128], strides = [1, 1]} : vector<9x128xf32> to vector<1x128xf32>
    %cst_2 = arith.constant 0.000000e+00 : f32
    %8 = vector.broadcast %cst_2 : f32 to vector<1x128xf32>
    %9 = arith.cmpf one, %7, %8 : vector<1x128xf32>
    %10 = vector.extract_strided_slice %0 {offsets = [3, 0], sizes = [1, 128], strides = [1, 1]} : vector<9x128xf32> to vector<1x128xf32>
    %cst_3 = arith.constant 0.000000e+00 : f32
    %11 = vector.broadcast %cst_3 : f32 to vector<1x128xf32>
    %12 = arith.cmpf one, %10, %11 : vector<1x128xf32>
    %13 = vector.extract_strided_slice %0 {offsets = [5, 0], sizes = [1, 128], strides = [1, 1]} : vector<9x128xf32> to vector<1x128xf32>
    %cst_4 = arith.constant 0.000000e+00 : f32
    %14 = vector.broadcast %cst_4 : f32 to vector<1x128xf32>
    %15 = arith.cmpf one, %13, %14 : vector<1x128xf32>
    %16 = vector.extract_strided_slice %0 {offsets = [6, 0], sizes = [1, 128], strides = [1, 1]} : vector<9x128xf32> to vector<1x128xf32>
    %cst_5 = arith.constant 0.000000e+00 : f32
    %17 = vector.broadcast %cst_5 : f32 to vector<1x128xf32>
    %18 = arith.cmpf one, %16, %17 : vector<1x128xf32>
    %19 = vector.extract_strided_slice %0 {offsets = [7, 0], sizes = [1, 128], strides = [1, 1]} : vector<9x128xf32> to vector<1x128xf32>
    %cst_6 = arith.constant 0.000000e+00 : f32
    %20 = vector.broadcast %cst_6 : f32 to vector<1x128xf32>
    %21 = arith.cmpf one, %19, %20 : vector<1x128xf32>
    %22 = vector.extract_strided_slice %0 {offsets = [8, 0], sizes = [1, 128], strides = [1, 1]} : vector<9x128xf32> to vector<1x128xf32>
    %cst_7 = arith.constant 0.000000e+00 : f32
    %23 = vector.broadcast %cst_7 : f32 to vector<1x128xf32>
    %24 = arith.cmpf one, %22, %23 : vector<1x128xf32>
    %c0_8 = arith.constant 0 : index
    %c0_9 = arith.constant 0 : index
    %25 = vector.load %arg0[%c0_8, %c0_9] : memref<8x128xf32, #tpu.memory_space<vmem>>, vector<8x128xf32>
    %c0_10 = arith.constant 0 : index
    %c0_11 = arith.constant 0 : index
    %c0_12 = arith.constant 0 : index
    %26 = vector.load %arg4[%c0_10, %c0_11, %c0_12] : memref<3x8x74xf32, #tpu.memory_space<vmem>>, vector<1x8x74xf32>
    %27 = vector.shape_cast %26 : vector<1x8x74xf32> to vector<8x74xf32>
    %28 = vector.extract_strided_slice %27 {offsets = [0, 0], sizes = [8, 72], strides = [1, 1]} : vector<8x74xf32> to vector<8x72xf32>
    %29 = vector.extract_strided_slice %27 {offsets = [0, 72], sizes = [8, 1], strides = [1, 1]} : vector<8x74xf32> to vector<8x1xf32>
    %30 = vector.extract_strided_slice %27 {offsets = [0, 73], sizes = [8, 1], strides = [1, 1]} : vector<8x74xf32> to vector<8x1xf32>
    %c9_i32 = arith.constant 9 : i32
    %31 = tpu.dynamic_rotate %25 by %c9_i32 dim 1 : vector<8x128xf32>, i32 -> vector<8x128xf32>
    %cst_13 = arith.constant 0.000000e+00 : f32
    %32 = vector.shape_cast %3 : vector<1x128xi1> to vector<1x128xi1>
    %33 = vector.broadcast %32 : vector<1x128xi1> to vector<8x128xi1>
    %34 = vector.broadcast %cst_13 : f32 to vector<8x128xf32>
    %35 = arith.select %33, %31, %34 : vector<8x128xi1>, vector<8x128xf32>
    %c8_i32 = arith.constant 8 : i32
    %36 = tpu.dynamic_rotate %25 by %c8_i32 dim 1 : vector<8x128xf32>, i32 -> vector<8x128xf32>
    %cst_14 = arith.constant 0.000000e+00 : f32
    %37 = vector.shape_cast %6 : vector<1x128xi1> to vector<1x128xi1>
    %38 = vector.broadcast %37 : vector<1x128xi1> to vector<8x128xi1>
    %39 = vector.broadcast %cst_14 : f32 to vector<8x128xf32>
    %40 = arith.select %38, %36, %39 : vector<8x128xi1>, vector<8x128xf32>
    %c7_i32 = arith.constant 7 : i32
    %41 = tpu.dynamic_rotate %25 by %c7_i32 dim 1 : vector<8x128xf32>, i32 -> vector<8x128xf32>
    %cst_15 = arith.constant 0.000000e+00 : f32
    %42 = vector.shape_cast %9 : vector<1x128xi1> to vector<1x128xi1>
    %43 = vector.broadcast %42 : vector<1x128xi1> to vector<8x128xi1>
    %44 = vector.broadcast %cst_15 : f32 to vector<8x128xf32>
    %45 = arith.select %43, %41, %44 : vector<8x128xi1>, vector<8x128xf32>
    %c1_i32 = arith.constant 1 : i32
    %46 = tpu.dynamic_rotate %25 by %c1_i32 dim 1 : vector<8x128xf32>, i32 -> vector<8x128xf32>
    %cst_16 = arith.constant 0.000000e+00 : f32
    %47 = vector.shape_cast %12 : vector<1x128xi1> to vector<1x128xi1>
    %48 = vector.broadcast %47 : vector<1x128xi1> to vector<8x128xi1>
    %49 = vector.broadcast %cst_16 : f32 to vector<8x128xf32>
    %50 = arith.select %48, %46, %49 : vector<8x128xi1>, vector<8x128xf32>
    %c127_i32 = arith.constant 127 : i32
    %51 = tpu.dynamic_rotate %25 by %c127_i32 dim 1 : vector<8x128xf32>, i32 -> vector<8x128xf32>
    %cst_17 = arith.constant 0.000000e+00 : f32
    %52 = vector.shape_cast %15 : vector<1x128xi1> to vector<1x128xi1>
    %53 = vector.broadcast %52 : vector<1x128xi1> to vector<8x128xi1>
    %54 = vector.broadcast %cst_17 : f32 to vector<8x128xf32>
    %55 = arith.select %53, %51, %54 : vector<8x128xi1>, vector<8x128xf32>
    %c121_i32 = arith.constant 121 : i32
    %56 = tpu.dynamic_rotate %25 by %c121_i32 dim 1 : vector<8x128xf32>, i32 -> vector<8x128xf32>
    %cst_18 = arith.constant 0.000000e+00 : f32
    %57 = vector.shape_cast %18 : vector<1x128xi1> to vector<1x128xi1>
    %58 = vector.broadcast %57 : vector<1x128xi1> to vector<8x128xi1>
    %59 = vector.broadcast %cst_18 : f32 to vector<8x128xf32>
    %60 = arith.select %58, %56, %59 : vector<8x128xi1>, vector<8x128xf32>
    %c120_i32 = arith.constant 120 : i32
    %61 = tpu.dynamic_rotate %25 by %c120_i32 dim 1 : vector<8x128xf32>, i32 -> vector<8x128xf32>
    %cst_19 = arith.constant 0.000000e+00 : f32
    %62 = vector.shape_cast %21 : vector<1x128xi1> to vector<1x128xi1>
    %63 = vector.broadcast %62 : vector<1x128xi1> to vector<8x128xi1>
    %64 = vector.broadcast %cst_19 : f32 to vector<8x128xf32>
    %65 = arith.select %63, %61, %64 : vector<8x128xi1>, vector<8x128xf32>
    %c119_i32 = arith.constant 119 : i32
    %66 = tpu.dynamic_rotate %25 by %c119_i32 dim 1 : vector<8x128xf32>, i32 -> vector<8x128xf32>
    %cst_20 = arith.constant 0.000000e+00 : f32
    %67 = vector.shape_cast %24 : vector<1x128xi1> to vector<1x128xi1>
    %68 = vector.broadcast %67 : vector<1x128xi1> to vector<8x128xi1>
    %69 = vector.broadcast %cst_20 : f32 to vector<8x128xf32>
    %70 = arith.select %68, %66, %69 : vector<8x128xi1>, vector<8x128xf32>
    %71 = tpu.concatenate %35, %40, %45, %50, %25, %55, %60, %65, %70 in 0 : vector<8x128xf32>, vector<8x128xf32>, vector<8x128xf32>, vector<8x128xf32>, vector<8x128xf32>, vector<8x128xf32>, vector<8x128xf32>, vector<8x128xf32>, vector<8x128xf32> -> vector<72x128xf32>
    %cst_21 = arith.constant dense<0.000000e+00> : vector<8x128xf32>
    %72 = tpu.matmul %28, %71, %cst_21 {dimension_numbers = #tpu.dot_dimension_numbers<[1], [0], [0], [1], [0, 0, 1, 1], [], []>} : vector<8x72xf32>, vector<72x128xf32>, vector<8x128xf32> -> vector<8x128xf32>
    %cst_22 = arith.constant 0.000000e+00 : f32
    %73 = vector.broadcast %cst_22 : f32 to vector<8x128xf32>
    %74 = arith.maximumf %72, %73 : vector<8x128xf32>
    %75 = vector.broadcast %29 : vector<8x1xf32> to vector<8x128xf32>
    %76 = arith.mulf %74, %75 : vector<8x128xf32>
    %77 = vector.broadcast %30 : vector<8x1xf32> to vector<8x128xf32>
    %78 = arith.addf %76, %77 : vector<8x128xf32>
    %c1 = arith.constant 1 : index
    %c0_23 = arith.constant 0 : index
    %c0_24 = arith.constant 0 : index
    %79 = vector.load %arg4[%c1, %c0_23, %c0_24] : memref<3x8x74xf32, #tpu.memory_space<vmem>>, vector<1x8x74xf32>
    %80 = vector.shape_cast %79 : vector<1x8x74xf32> to vector<8x74xf32>
    %81 = vector.extract_strided_slice %80 {offsets = [0, 0], sizes = [8, 72], strides = [1, 1]} : vector<8x74xf32> to vector<8x72xf32>
    %82 = vector.extract_strided_slice %80 {offsets = [0, 72], sizes = [8, 1], strides = [1, 1]} : vector<8x74xf32> to vector<8x1xf32>
    %83 = vector.extract_strided_slice %80 {offsets = [0, 73], sizes = [8, 1], strides = [1, 1]} : vector<8x74xf32> to vector<8x1xf32>
    %c9_i32_25 = arith.constant 9 : i32
    %84 = tpu.dynamic_rotate %78 by %c9_i32_25 dim 1 : vector<8x128xf32>, i32 -> vector<8x128xf32>
    %cst_26 = arith.constant 0.000000e+00 : f32
    %85 = vector.shape_cast %3 : vector<1x128xi1> to vector<1x128xi1>
    %86 = vector.broadcast %85 : vector<1x128xi1> to vector<8x128xi1>
    %87 = vector.broadcast %cst_26 : f32 to vector<8x128xf32>
    %88 = arith.select %86, %84, %87 : vector<8x128xi1>, vector<8x128xf32>
    %c8_i32_27 = arith.constant 8 : i32
    %89 = tpu.dynamic_rotate %78 by %c8_i32_27 dim 1 : vector<8x128xf32>, i32 -> vector<8x128xf32>
    %cst_28 = arith.constant 0.000000e+00 : f32
    %90 = vector.shape_cast %6 : vector<1x128xi1> to vector<1x128xi1>
    %91 = vector.broadcast %90 : vector<1x128xi1> to vector<8x128xi1>
    %92 = vector.broadcast %cst_28 : f32 to vector<8x128xf32>
    %93 = arith.select %91, %89, %92 : vector<8x128xi1>, vector<8x128xf32>
    %c7_i32_29 = arith.constant 7 : i32
    %94 = tpu.dynamic_rotate %78 by %c7_i32_29 dim 1 : vector<8x128xf32>, i32 -> vector<8x128xf32>
    %cst_30 = arith.constant 0.000000e+00 : f32
    %95 = vector.shape_cast %9 : vector<1x128xi1> to vector<1x128xi1>
    %96 = vector.broadcast %95 : vector<1x128xi1> to vector<8x128xi1>
    %97 = vector.broadcast %cst_30 : f32 to vector<8x128xf32>
    %98 = arith.select %96, %94, %97 : vector<8x128xi1>, vector<8x128xf32>
    %c1_i32_31 = arith.constant 1 : i32
    %99 = tpu.dynamic_rotate %78 by %c1_i32_31 dim 1 : vector<8x128xf32>, i32 -> vector<8x128xf32>
    %cst_32 = arith.constant 0.000000e+00 : f32
    %100 = vector.shape_cast %12 : vector<1x128xi1> to vector<1x128xi1>
    %101 = vector.broadcast %100 : vector<1x128xi1> to vector<8x128xi1>
    %102 = vector.broadcast %cst_32 : f32 to vector<8x128xf32>
    %103 = arith.select %101, %99, %102 : vector<8x128xi1>, vector<8x128xf32>
    %c127_i32_33 = arith.constant 127 : i32
    %104 = tpu.dynamic_rotate %78 by %c127_i32_33 dim 1 : vector<8x128xf32>, i32 -> vector<8x128xf32>
    %cst_34 = arith.constant 0.000000e+00 : f32
    %105 = vector.shape_cast %15 : vector<1x128xi1> to vector<1x128xi1>
    %106 = vector.broadcast %105 : vector<1x128xi1> to vector<8x128xi1>
    %107 = vector.broadcast %cst_34 : f32 to vector<8x128xf32>
    %108 = arith.select %106, %104, %107 : vector<8x128xi1>, vector<8x128xf32>
    %c121_i32_35 = arith.constant 121 : i32
    %109 = tpu.dynamic_rotate %78 by %c121_i32_35 dim 1 : vector<8x128xf32>, i32 -> vector<8x128xf32>
    %cst_36 = arith.constant 0.000000e+00 : f32
    %110 = vector.shape_cast %18 : vector<1x128xi1> to vector<1x128xi1>
    %111 = vector.broadcast %110 : vector<1x128xi1> to vector<8x128xi1>
    %112 = vector.broadcast %cst_36 : f32 to vector<8x128xf32>
    %113 = arith.select %111, %109, %112 : vector<8x128xi1>, vector<8x128xf32>
    %c120_i32_37 = arith.constant 120 : i32
    %114 = tpu.dynamic_rotate %78 by %c120_i32_37 dim 1 : vector<8x128xf32>, i32 -> vector<8x128xf32>
    %cst_38 = arith.constant 0.000000e+00 : f32
    %115 = vector.shape_cast %21 : vector<1x128xi1> to vector<1x128xi1>
    %116 = vector.broadcast %115 : vector<1x128xi1> to vector<8x128xi1>
    %117 = vector.broadcast %cst_38 : f32 to vector<8x128xf32>
    %118 = arith.select %116, %114, %117 : vector<8x128xi1>, vector<8x128xf32>
    %c119_i32_39 = arith.constant 119 : i32
    %119 = tpu.dynamic_rotate %78 by %c119_i32_39 dim 1 : vector<8x128xf32>, i32 -> vector<8x128xf32>
    %cst_40 = arith.constant 0.000000e+00 : f32
    %120 = vector.shape_cast %24 : vector<1x128xi1> to vector<1x128xi1>
    %121 = vector.broadcast %120 : vector<1x128xi1> to vector<8x128xi1>
    %122 = vector.broadcast %cst_40 : f32 to vector<8x128xf32>
    %123 = arith.select %121, %119, %122 : vector<8x128xi1>, vector<8x128xf32>
    %124 = tpu.concatenate %88, %93, %98, %103, %78, %108, %113, %118, %123 in 0 : vector<8x128xf32>, vector<8x128xf32>, vector<8x128xf32>, vector<8x128xf32>, vector<8x128xf32>, vector<8x128xf32>, vector<8x128xf32>, vector<8x128xf32>, vector<8x128xf32> -> vector<72x128xf32>
    %cst_41 = arith.constant dense<0.000000e+00> : vector<8x128xf32>
    %125 = tpu.matmul %81, %124, %cst_41 {dimension_numbers = #tpu.dot_dimension_numbers<[1], [0], [0], [1], [0, 0, 1, 1], [], []>} : vector<8x72xf32>, vector<72x128xf32>, vector<8x128xf32> -> vector<8x128xf32>
    %cst_42 = arith.constant 0.000000e+00 : f32
    %126 = vector.broadcast %cst_42 : f32 to vector<8x128xf32>
    %127 = arith.maximumf %125, %126 : vector<8x128xf32>
    %128 = vector.broadcast %82 : vector<8x1xf32> to vector<8x128xf32>
    %129 = arith.mulf %127, %128 : vector<8x128xf32>
    %130 = vector.broadcast %83 : vector<8x1xf32> to vector<8x128xf32>
    %131 = arith.addf %129, %130 : vector<8x128xf32>
    %c2 = arith.constant 2 : index
    %c0_43 = arith.constant 0 : index
    %c0_44 = arith.constant 0 : index
    %132 = vector.load %arg4[%c2, %c0_43, %c0_44] : memref<3x8x74xf32, #tpu.memory_space<vmem>>, vector<1x8x74xf32>
    %133 = vector.shape_cast %132 : vector<1x8x74xf32> to vector<8x74xf32>
    %134 = vector.extract_strided_slice %133 {offsets = [0, 0], sizes = [8, 72], strides = [1, 1]} : vector<8x74xf32> to vector<8x72xf32>
    %135 = vector.extract_strided_slice %133 {offsets = [0, 72], sizes = [8, 1], strides = [1, 1]} : vector<8x74xf32> to vector<8x1xf32>
    %136 = vector.extract_strided_slice %133 {offsets = [0, 73], sizes = [8, 1], strides = [1, 1]} : vector<8x74xf32> to vector<8x1xf32>
    %c9_i32_45 = arith.constant 9 : i32
    %137 = tpu.dynamic_rotate %131 by %c9_i32_45 dim 1 : vector<8x128xf32>, i32 -> vector<8x128xf32>
    %cst_46 = arith.constant 0.000000e+00 : f32
    %138 = vector.shape_cast %3 : vector<1x128xi1> to vector<1x128xi1>
    %139 = vector.broadcast %138 : vector<1x128xi1> to vector<8x128xi1>
    %140 = vector.broadcast %cst_46 : f32 to vector<8x128xf32>
    %141 = arith.select %139, %137, %140 : vector<8x128xi1>, vector<8x128xf32>
    %c8_i32_47 = arith.constant 8 : i32
    %142 = tpu.dynamic_rotate %131 by %c8_i32_47 dim 1 : vector<8x128xf32>, i32 -> vector<8x128xf32>
    %cst_48 = arith.constant 0.000000e+00 : f32
    %143 = vector.shape_cast %6 : vector<1x128xi1> to vector<1x128xi1>
    %144 = vector.broadcast %143 : vector<1x128xi1> to vector<8x128xi1>
    %145 = vector.broadcast %cst_48 : f32 to vector<8x128xf32>
    %146 = arith.select %144, %142, %145 : vector<8x128xi1>, vector<8x128xf32>
    %c7_i32_49 = arith.constant 7 : i32
    %147 = tpu.dynamic_rotate %131 by %c7_i32_49 dim 1 : vector<8x128xf32>, i32 -> vector<8x128xf32>
    %cst_50 = arith.constant 0.000000e+00 : f32
    %148 = vector.shape_cast %9 : vector<1x128xi1> to vector<1x128xi1>
    %149 = vector.broadcast %148 : vector<1x128xi1> to vector<8x128xi1>
    %150 = vector.broadcast %cst_50 : f32 to vector<8x128xf32>
    %151 = arith.select %149, %147, %150 : vector<8x128xi1>, vector<8x128xf32>
    %c1_i32_51 = arith.constant 1 : i32
    %152 = tpu.dynamic_rotate %131 by %c1_i32_51 dim 1 : vector<8x128xf32>, i32 -> vector<8x128xf32>
    %cst_52 = arith.constant 0.000000e+00 : f32
    %153 = vector.shape_cast %12 : vector<1x128xi1> to vector<1x128xi1>
    %154 = vector.broadcast %153 : vector<1x128xi1> to vector<8x128xi1>
    %155 = vector.broadcast %cst_52 : f32 to vector<8x128xf32>
    %156 = arith.select %154, %152, %155 : vector<8x128xi1>, vector<8x128xf32>
    %c127_i32_53 = arith.constant 127 : i32
    %157 = tpu.dynamic_rotate %131 by %c127_i32_53 dim 1 : vector<8x128xf32>, i32 -> vector<8x128xf32>
    %cst_54 = arith.constant 0.000000e+00 : f32
    %158 = vector.shape_cast %15 : vector<1x128xi1> to vector<1x128xi1>
    %159 = vector.broadcast %158 : vector<1x128xi1> to vector<8x128xi1>
    %160 = vector.broadcast %cst_54 : f32 to vector<8x128xf32>
    %161 = arith.select %159, %157, %160 : vector<8x128xi1>, vector<8x128xf32>
    %c121_i32_55 = arith.constant 121 : i32
    %162 = tpu.dynamic_rotate %131 by %c121_i32_55 dim 1 : vector<8x128xf32>, i32 -> vector<8x128xf32>
    %cst_56 = arith.constant 0.000000e+00 : f32
    %163 = vector.shape_cast %18 : vector<1x128xi1> to vector<1x128xi1>
    %164 = vector.broadcast %163 : vector<1x128xi1> to vector<8x128xi1>
    %165 = vector.broadcast %cst_56 : f32 to vector<8x128xf32>
    %166 = arith.select %164, %162, %165 : vector<8x128xi1>, vector<8x128xf32>
    %c120_i32_57 = arith.constant 120 : i32
    %167 = tpu.dynamic_rotate %131 by %c120_i32_57 dim 1 : vector<8x128xf32>, i32 -> vector<8x128xf32>
    %cst_58 = arith.constant 0.000000e+00 : f32
    %168 = vector.shape_cast %21 : vector<1x128xi1> to vector<1x128xi1>
    %169 = vector.broadcast %168 : vector<1x128xi1> to vector<8x128xi1>
    %170 = vector.broadcast %cst_58 : f32 to vector<8x128xf32>
    %171 = arith.select %169, %167, %170 : vector<8x128xi1>, vector<8x128xf32>
    %c119_i32_59 = arith.constant 119 : i32
    %172 = tpu.dynamic_rotate %131 by %c119_i32_59 dim 1 : vector<8x128xf32>, i32 -> vector<8x128xf32>
    %cst_60 = arith.constant 0.000000e+00 : f32
    %173 = vector.shape_cast %24 : vector<1x128xi1> to vector<1x128xi1>
    %174 = vector.broadcast %173 : vector<1x128xi1> to vector<8x128xi1>
    %175 = vector.broadcast %cst_60 : f32 to vector<8x128xf32>
    %176 = arith.select %174, %172, %175 : vector<8x128xi1>, vector<8x128xf32>
    %177 = tpu.concatenate %141, %146, %151, %156, %131, %161, %166, %171, %176 in 0 : vector<8x128xf32>, vector<8x128xf32>, vector<8x128xf32>, vector<8x128xf32>, vector<8x128xf32>, vector<8x128xf32>, vector<8x128xf32>, vector<8x128xf32>, vector<8x128xf32> -> vector<72x128xf32>
    %cst_61 = arith.constant dense<0.000000e+00> : vector<8x128xf32>
    %178 = tpu.matmul %134, %177, %cst_61 {dimension_numbers = #tpu.dot_dimension_numbers<[1], [0], [0], [1], [0, 0, 1, 1], [], []>} : vector<8x72xf32>, vector<72x128xf32>, vector<8x128xf32> -> vector<8x128xf32>
    %cst_62 = arith.constant 0.000000e+00 : f32
    %179 = vector.broadcast %cst_62 : f32 to vector<8x128xf32>
    %180 = arith.maximumf %178, %179 : vector<8x128xf32>
    %181 = vector.broadcast %135 : vector<8x1xf32> to vector<8x128xf32>
    %182 = arith.mulf %180, %181 : vector<8x128xf32>
    %183 = vector.broadcast %136 : vector<8x1xf32> to vector<8x128xf32>
    %184 = arith.addf %182, %183 : vector<8x128xf32>
    %185 = vector.extract_strided_slice %184 {offsets = [0, 0], sizes = [8, 64], strides = [1, 1]} : vector<8x128xf32> to vector<8x64xf32>
    %186 = vector.extract_strided_slice %184 {offsets = [0, 64], sizes = [8, 64], strides = [1, 1]} : vector<8x128xf32> to vector<8x64xf32>
    %187 = tpu.concatenate %185, %186 in 0 : vector<8x64xf32>, vector<8x64xf32> -> vector<16x64xf32>
    %c0_63 = arith.constant 0 : index
    %c0_64 = arith.constant 0 : index
    %188 = vector.load %arg3[%c0_63, %c0_64] : memref<64x256xf32, #tpu.memory_space<vmem>>, vector<64x256xf32>
    %cst_65 = arith.constant dense<0.000000e+00> : vector<16x256xf32>
    %189 = tpu.matmul %187, %188, %cst_65 {dimension_numbers = #tpu.dot_dimension_numbers<[1], [0], [0], [1], [0, 0, 1, 1], [], []>} : vector<16x64xf32>, vector<64x256xf32>, vector<16x256xf32> -> vector<16x256xf32>
    %190 = vector.extract_strided_slice %189 {offsets = [0, 0], sizes = [8, 256], strides = [1, 1]} : vector<16x256xf32> to vector<8x256xf32>
    %c4_i32 = arith.constant 4 : i32
    %191 = tpu.dynamic_rotate %190 by %c4_i32 dim 0 : vector<8x256xf32>, i32 -> vector<8x256xf32>
    %c0_66 = arith.constant 0 : index
    %c0_67 = arith.constant 0 : index
    %c0_68 = arith.constant 0 : index
    %192 = vector.load %arg1[%c0_66, %c0_67, %c0_68] : memref<2x8x256xf32, #tpu.memory_space<vmem>>, vector<1x8x256xf32>
    %193 = vector.shape_cast %192 : vector<1x8x256xf32> to vector<8x256xf32>
    %194 = arith.addf %193, %191 : vector<8x256xf32>
    %195 = vector.extract_strided_slice %189 {offsets = [8, 0], sizes = [8, 256], strides = [1, 1]} : vector<16x256xf32> to vector<8x256xf32>
    %c4_i32_69 = arith.constant 4 : i32
    %196 = tpu.dynamic_rotate %195 by %c4_i32_69 dim 0 : vector<8x256xf32>, i32 -> vector<8x256xf32>
    %c1_70 = arith.constant 1 : index
    %c0_71 = arith.constant 0 : index
    %c0_72 = arith.constant 0 : index
    %197 = vector.load %arg1[%c1_70, %c0_71, %c0_72] : memref<2x8x256xf32, #tpu.memory_space<vmem>>, vector<1x8x256xf32>
    %198 = vector.shape_cast %197 : vector<1x8x256xf32> to vector<8x256xf32>
    %199 = arith.addf %198, %196 : vector<8x256xf32>
    %200 = vector.shape_cast %194 : vector<8x256xf32> to vector<1x8x256xf32>
    %201 = vector.shape_cast %199 : vector<8x256xf32> to vector<1x8x256xf32>
    %202 = tpu.concatenate %200, %201 in 0 : vector<1x8x256xf32>, vector<1x8x256xf32> -> vector<2x8x256xf32>
    %c0_73 = arith.constant 0 : index
    %c0_74 = arith.constant 0 : index
    %c0_75 = arith.constant 0 : index
    %203 = vector.load %arg5[%c0_73, %c0_74, %c0_75] : memref<2x8x256xf32, #tpu.memory_space<vmem>>, vector<2x8x256xf32>
    tpu.vector_store %arg5[%c0_73, %c0_74, %c0_75], %202 {strides = array<i32>} : memref<2x8x256xf32, #tpu.memory_space<vmem>>, vector<2x8x256xf32>,
    return
  }
}

</mosaic_0001>

<llo_original>
// kernel: up_triple_forward.1
$region0: #{up_triple_forward.1}
  #allocation0 [shape = 'u32[]', space=smem, size = 0x4, offset = 0x4, fixed_abs, tag = 'smem constant byte address 0x4 - core index']
  #allocation1 [shape = 'u32[144,128]{1,0:T(1,128)}', space=vmem, size = 0x12000, scoped, tag = 'internal scratch']
  %s0 = inlined_call_operand.vmem [shape: f32[8,128], index: 0, kind: input, shape index: {}]
  %s1 = inlined_call_operand.vmem [shape: f32[2,8,256], index: 1, kind: input, shape index: {}]
  %s2 = inlined_call_operand.vmem [shape: f32[9,128], index: 2, kind: input, shape index: {}]
  %s3 = inlined_call_operand.vmem [shape: f32[64,256], index: 3, kind: input, shape index: {}]
  %s4 = inlined_call_operand.vmem [shape: f32[3,8,74], index: 4, kind: input, shape index: {}]
  %s5 = inlined_call_operand.vmem [shape: f32[2,8,256], index: 5, kind: output, shape index: {}]
  %s6 = sld [smem:[#allocation0]]
  $region30: #{up_triple_forward.1} parent=0
    _
  %s8 = ssub.s32 1, %s6
  %s9 = scalar_select 0, %s8, %s6
  // Predicated region
  $region2: #{up_triple_forward.1} parent=0 // pred_check
    _
  $region3: #{up_triple_forward.1} parent=0 // pred_check_branch
    %11 = sbr.rel (0) target = $region5
  $region4: #{up_triple_forward.1} parent=0 // pred_region
    _
  $region5: #{up_triple_forward.1} parent=0 // pred_fallthru
    _
  // Predicated region
  $region6: #{up_triple_forward.1} parent=0 // pred_check
    _
  $region7: #{up_triple_forward.1} parent=0 // pred_check_branch
    %13 = sbr.rel (0) target = $region9
  $region8: #{up_triple_forward.1} parent=0 // pred_region
    _
  $region9: #{up_triple_forward.1} parent=0 // pred_fallthru
    _
  // Predicated region
  $region10: #{up_triple_forward.1} parent=0 // pred_check
    _
  $region11: #{up_triple_forward.1} parent=0 // pred_check_branch
    %15 = sbr.rel (0) target = $region13
  $region12: #{up_triple_forward.1} parent=0 // pred_region
    _
  $region13: #{up_triple_forward.1} parent=0 // pred_fallthru
    _
  // Predicated region
  $region14: #{up_triple_forward.1} parent=0 // pred_check
    _
  $region15: #{up_triple_forward.1} parent=0 // pred_check_branch
    %17 = sbr.rel (0) target = $region17
  $region16: #{up_triple_forward.1} parent=0 // pred_region
    _
  $region17: #{up_triple_forward.1} parent=0 // pred_fallthru
    _
  // Predicated region
  $region18: #{up_triple_forward.1} parent=0 // pred_check
    _
  $region19: #{up_triple_forward.1} parent=0 // pred_check_branch
    %19 = sbr.rel (0) target = $region21
  $region20: #{up_triple_forward.1} parent=0 // pred_region
    _
  $region21: #{up_triple_forward.1} parent=0 // pred_fallthru
    _
  %v20 = vld [vmem:[%s2] sm:$0xff]
  %v21 = vld [vmem:[%s2 + $0x8] sm:$0x1]
  %vm22 = vcmp.ne.f32.partialorder %v20, 0.0
  %vm23 = vcmp.ne.f32.partialorder %v21, 0.0
  %v24 = vld [vmem:[%s0] sm:$0xff]
  %v25 = vld [vmem:[%s4] sm:$0xff]
  %26 = vrot.lane.b32.xlu0 %v24, 9
  %v27 = vpop.permute.xlu0 %26
  %v28 = vsel %vm22, 1, 0
  %v29 = vlaneseq
  %v30 = vshrl.u32 %v29, 7
  %v31 = vsub.s32 0, %v30
  %v32 = vrot.slane %v28, %v31
  %vm33 = vcmp.eq.s32.totalorder %v32, 1
  %v34 = vsel %vm33, %v27, 0.0
  %35 = vrot.lane.b32.xlu0 %v24, 8
  %v36 = vpop.permute.xlu0 %35
  %v37 = vlaneseq
  %v38 = vshrl.u32 %v37, 7
  %v39 = vsub.s32 1, %v38
  %v40 = vrot.slane %v28, %v39
  %vm41 = vcmp.eq.s32.totalorder %v40, 1
  %v42 = vsel %vm41, %v36, 0.0
  %43 = vrot.lane.b32.xlu0 %v24, 7
  %v44 = vpop.permute.xlu0 %43
  %v45 = vlaneseq
  %v46 = vshrl.u32 %v45, 7
  %v47 = vsub.s32 2, %v46
  %v48 = vrot.slane %v28, %v47
  %vm49 = vcmp.eq.s32.totalorder %v48, 1
  %v50 = vsel %vm49, %v44, 0.0
  %51 = vrot.lane.b32.xlu0 %v24, 1
  %v52 = vpop.permute.xlu0 %51
  %v53 = vlaneseq
  %v54 = vshrl.u32 %v53, 7
  %v55 = vsub.s32 3, %v54
  %v56 = vrot.slane %v28, %v55
  %vm57 = vcmp.eq.s32.totalorder %v56, 1
  %v58 = vsel %vm57, %v52, 0.0
  %59 = vrot.lane.b32.xlu0 %v24, 127
  %v60 = vpop.permute.xlu0 %59
  %v61 = vlaneseq
  %v62 = vshrl.u32 %v61, 7
  %v63 = vsub.s32 5, %v62
  %v64 = vrot.slane %v28, %v63
  %vm65 = vcmp.eq.s32.totalorder %v64, 1
  %v66 = vsel %vm65, %v60, 0.0
  %67 = vrot.lane.b32.xlu0 %v24, 121
  %v68 = vpop.permute.xlu0 %67
  %v69 = vlaneseq
  %v70 = vshrl.u32 %v69, 7
  %v71 = vsub.s32 6, %v70
  %v72 = vrot.slane %v28, %v71
  %vm73 = vcmp.eq.s32.totalorder %v72, 1
  %v74 = vsel %vm73, %v68, 0.0
  %75 = vrot.lane.b32.xlu0 %v24, 120
  %v76 = vpop.permute.xlu0 %75
  %v77 = vlaneseq
  %v78 = vshrl.u32 %v77, 7
  %v79 = vsub.s32 7, %v78
  %v80 = vrot.slane %v28, %v79
  %vm81 = vcmp.eq.s32.totalorder %v80, 1
  %v82 = vsel %vm81, %v76, 0.0
  %83 = vrot.lane.b32.xlu0 %v24, 119
  %v84 = vpop.permute.xlu0 %83
  %v85 = vsel %vm23, 1, 0
  %v86 = vlaneseq
  %v87 = vshrl.u32 %v86, 7
  %v88 = vsub.s32 0, %v87
  %v89 = vrot.slane %v85, %v88
  %vm90 = vcmp.eq.s32.totalorder %v89, 1
  %v91 = vsel %vm90, %v84, 0.0
  %vm92 = vcmask 588800
  %v94 = vsel %vm92, %v25, 0
  %96 = vmatprep.subr.mxu0 0.0
  %97 = vmatpush1.msra.mxu0 %v34
  %98 = vmatprep.subr.mxu0 0.0
  %99 = vmatpush1.msra.mxu0 %v42
  %100 = vmatprep.subr.mxu0 0.0
  %101 = vmatpush1.msra.mxu0 %v50
  %102 = vmatprep.subr.mxu0 0.0
  %103 = vmatpush1.msra.mxu0 %v58
  %104 = vmatprep.subr.mxu0 0.0
  %105 = vmatpush1.msra.mxu0 %v24
  %106 = vmatprep.subr.mxu0 0.0
  %107 = vmatpush1.msra.mxu0 %v66
  %108 = vmatprep.subr.mxu0 0.0
  %109 = vmatpush1.msra.mxu0 %v74
  %110 = vmatprep.subr.mxu0 0.0
  %111 = vmatpush1.msra.mxu0 %v82
  %112 = vmatprep.subr.mxu0 0.0
  %113 = vmatpush1.msra.mxu0 %v91
  %114 = vmatprep.subr.mxu0 0.0
  %115 = vmatpush1.msra.mxu0 0.0
  %116 = vmatprep.subr.mxu0 0.0
  %117 = vmatpush1.msra.mxu0 0.0
  %118 = vmatprep.subr.mxu0 0.0
  %119 = vmatpush1.msra.mxu0 0.0
  %120 = vmatprep.subr.mxu0 0.0
  %121 = vmatpush1.msra.mxu0 0.0
  %122 = vmatprep.subr.mxu0 0.0
  %123 = vmatpush1.msra.mxu0 0.0
  %124 = vmatprep.subr.mxu0 0.0
  %125 = vmatpush1.msra.mxu0 0.0
  %126 = vmatprep.subr.mxu0 0.0
  %127 = vmatpush1.msra.mxu0 0.0
  %128 = vmatprep.subr.mxu0 0.0
  %129 = vmatpush1.msra.mxu0 0.0
  %130 = vmatprep.subr.mxu0 0.0
  %131 = vmatpush1.msra.mxu0 0.0
  %132 = vmatprep.subr.mxu0 0.0
  %133 = vmatpush1.msra.mxu0 0.0
  %134 = vmatprep.subr.mxu0 0.0
  %135 = vmatpush1.msra.mxu0 0.0
  %136 = vmatprep.subr.mxu0 0.0
  %137 = vmatpush1.msra.mxu0 0.0
  %138 = vmatprep.subr.mxu0 0.0
  %139 = vmatpush1.msra.mxu0 0.0
  %140 = vmatprep.subr.mxu0 0.0
  %141 = vmatpush1.msra.mxu0 0.0
  %142 = vmatprep.subr.mxu0 0.0
  %143 = vmatpush1.msra.mxu0 0.0
  %144 = vmatprep.subr.mxu0 0.0
  %145 = vmatpush1.msra.mxu0 0.0
  %146 = vmatprep.subr.mxu0 0.0
  %147 = vmatpush1.msra.mxu0 0.0
  %148 = vmatprep.subr.mxu0 0.0
  %149 = vmatpush1.msra.mxu0 0.0
  %150 = vmatprep.subr.mxu0 0.0
  %151 = vmatpush1.msra.mxu0 0.0
  %152 = vmatprep.subr.mxu0 0.0
  %153 = vmatpush1.msra.mxu0 0.0
  %154 = vmatprep.subr.mxu0 0.0
  %155 = vmatpush1.msra.mxu0 0.0
  %156 = vmatprep.subr.mxu0 0.0
  %157 = vmatpush1.msra.mxu0 0.0
  %158 = vmatprep.subr.mxu0 0.0
  %159 = vmatpush1.msra.mxu0 0.0
  %160 = vmatprep.mubr.f32.mxu0 0.0
  %161 = vmatmul.mubr.f32.gmra.mrb[0].mxu0 %v94
  %v162 = vpop.f32.mrb[0].mxu0
  %v163 = vadd.f32 0.0, %v162
  %v164 = vpop.f32.mrb[0].mxu0
  %165 = vdwg.mxu0
  %v166 = vmax.f32 %v163, 0.0
  %167 = vset.pattern.permute.xlu0 72
  %168 = vperm.xlu0 %167, %v25
  %v169 = vpop.permute.xlu0 %168
  %v171 = vmul.f32 %v166, %v169
  %172 = vset.pattern.permute.xlu0 73
  %173 = vperm.xlu0 %172, %v25
  %v174 = vpop.permute.xlu0 %173
  %v176 = vadd.f32 %v171, %v174
  %s177 = scalar_lea.vmem %s4, 8
  %v178 = vld [vmem:[%s177] sm:$0xff]
  %179 = vrot.lane.b32.xlu0 %v176, 9
  %v180 = vpop.permute.xlu0 %179
  %v181 = vsel %vm33, %v180, 0.0
  %182 = vrot.lane.b32.xlu0 %v176, 8
  %v183 = vpop.permute.xlu0 %182
  %v184 = vsel %vm41, %v183, 0.0
  %185 = vrot.lane.b32.xlu0 %v176, 7
  %v186 = vpop.permute.xlu0 %185
  %v187 = vsel %vm49, %v186, 0.0
  %188 = vrot.lane.b32.xlu0 %v176, 1
  %v189 = vpop.permute.xlu0 %188
  %v190 = vsel %vm57, %v189, 0.0
  %191 = vrot.lane.b32.xlu0 %v176, 127
  %v192 = vpop.permute.xlu0 %191
  %v193 = vsel %vm65, %v192, 0.0
  %194 = vrot.lane.b32.xlu0 %v176, 121
  %v195 = vpop.permute.xlu0 %194
  %v196 = vsel %vm73, %v195, 0.0
  %197 = vrot.lane.b32.xlu0 %v176, 120
  %v198 = vpop.permute.xlu0 %197
  %v199 = vsel %vm81, %v198, 0.0
  %200 = vrot.lane.b32.xlu0 %v176, 119
  %v201 = vpop.permute.xlu0 %200
  %v202 = vsel %vm90, %v201, 0.0
  %v204 = vsel %vm92, %v178, 0
  %206 = vmatprep.subr.mxu0 0.0
  %207 = vmatpush1.msra.mxu0 %v181
  %208 = vmatprep.subr.mxu0 0.0
  %209 = vmatpush1.msra.mxu0 %v184
  %210 = vmatprep.subr.mxu0 0.0
  %211 = vmatpush1.msra.mxu0 %v187
  %212 = vmatprep.subr.mxu0 0.0
  %213 = vmatpush1.msra.mxu0 %v190
  %214 = vmatprep.subr.mxu0 0.0
  %215 = vmatpush1.msra.mxu0 %v176
  %216 = vmatprep.subr.mxu0 0.0
  %217 = vmatpush1.msra.mxu0 %v193
  %218 = vmatprep.subr.mxu0 0.0
  %219 = vmatpush1.msra.mxu0 %v196
  %220 = vmatprep.subr.mxu0 0.0
  %221 = vmatpush1.msra.mxu0 %v199
  %222 = vmatprep.subr.mxu0 0.0
  %223 = vmatpush1.msra.mxu0 %v202
  %224 = vmatprep.subr.mxu0 0.0
  %225 = vmatpush1.msra.mxu0 0.0
  %226 = vmatprep.subr.mxu0 0.0
  %227 = vmatpush1.msra.mxu0 0.0
  %228 = vmatprep.subr.mxu0 0.0
  %229 = vmatpush1.msra.mxu0 0.0
  %230 = vmatprep.subr.mxu0 0.0
  %231 = vmatpush1.msra.mxu0 0.0
  %232 = vmatprep.subr.mxu0 0.0
  %233 = vmatpush1.msra.mxu0 0.0
  %234 = vmatprep.subr.mxu0 0.0
  %235 = vmatpush1.msra.mxu0 0.0
  %236 = vmatprep.subr.mxu0 0.0
  %237 = vmatpush1.msra.mxu0 0.0
  %238 = vmatprep.subr.mxu0 0.0
  %239 = vmatpush1.msra.mxu0 0.0
  %240 = vmatprep.subr.mxu0 0.0
  %241 = vmatpush1.msra.mxu0 0.0
  %242 = vmatprep.subr.mxu0 0.0
  %243 = vmatpush1.msra.mxu0 0.0
  %244 = vmatprep.subr.mxu0 0.0
  %245 = vmatpush1.msra.mxu0 0.0
  %246 = vmatprep.subr.mxu0 0.0
  %247 = vmatpush1.msra.mxu0 0.0
  %248 = vmatprep.subr.mxu0 0.0
  %249 = vmatpush1.msra.mxu0 0.0
  %250 = vmatprep.subr.mxu0 0.0
  %251 = vmatpush1.msra.mxu0 0.0
  %252 = vmatprep.subr.mxu0 0.0
  %253 = vmatpush1.msra.mxu0 0.0
  %254 = vmatprep.subr.mxu0 0.0
  %255 = vmatpush1.msra.mxu0 0.0
  %256 = vmatprep.subr.mxu0 0.0
  %257 = vmatpush1.msra.mxu0 0.0
  %258 = vmatprep.subr.mxu0 0.0
  %259 = vmatpush1.msra.mxu0 0.0
  %260 = vmatprep.subr.mxu0 0.0
  %261 = vmatpush1.msra.mxu0 0.0
  %262 = vmatprep.subr.mxu0 0.0
  %263 = vmatpush1.msra.mxu0 0.0
  %264 = vmatprep.subr.mxu0 0.0
  %265 = vmatpush1.msra.mxu0 0.0
  %266 = vmatprep.subr.mxu0 0.0
  %267 = vmatpush1.msra.mxu0 0.0
  %268 = vmatprep.subr.mxu0 0.0
  %269 = vmatpush1.msra.mxu0 0.0
  %270 = vmatprep.mubr.f32.mxu0 0.0
  %271 = vmatmul.mubr.f32.gmra.mrb[0].mxu0 %v204
  %v272 = vpop.f32.mrb[0].mxu0
  %v273 = vadd.f32 0.0, %v272
  %v274 = vpop.f32.mrb[0].mxu0
  %275 = vdwg.mxu0
  %v276 = vmax.f32 %v273, 0.0
  %277 = vset.pattern.permute.xlu0 72
  %278 = vperm.xlu0 %277, %v178
  %v279 = vpop.permute.xlu0 %278
  %v281 = vmul.f32 %v276, %v279
  %282 = vset.pattern.permute.xlu0 73
  %283 = vperm.xlu0 %282, %v178
  %v284 = vpop.permute.xlu0 %283
  %v286 = vadd.f32 %v281, %v284
  %s287 = scalar_lea.vmem %s4, 16
  %v288 = vld [vmem:[%s287] sm:$0xff]
  %289 = vrot.lane.b32.xlu0 %v286, 9
  %v290 = vpop.permute.xlu0 %289
  %v291 = vsel %vm33, %v290, 0.0
  %292 = vrot.lane.b32.xlu0 %v286, 8
  %v293 = vpop.permute.xlu0 %292
  %v294 = vsel %vm41, %v293, 0.0
  %295 = vrot.lane.b32.xlu0 %v286, 7
  %v296 = vpop.permute.xlu0 %295
  %v297 = vsel %vm49, %v296, 0.0
  %298 = vrot.lane.b32.xlu0 %v286, 1
  %v299 = vpop.permute.xlu0 %298
  %v300 = vsel %vm57, %v299, 0.0
  %301 = vrot.lane.b32.xlu0 %v286, 127
  %v302 = vpop.permute.xlu0 %301
  %v303 = vsel %vm65, %v302, 0.0
  %304 = vrot.lane.b32.xlu0 %v286, 121
  %v305 = vpop.permute.xlu0 %304
  %v306 = vsel %vm73, %v305, 0.0
  %307 = vrot.lane.b32.xlu0 %v286, 120
  %v308 = vpop.permute.xlu0 %307
  %v309 = vsel %vm81, %v308, 0.0
  %310 = vrot.lane.b32.xlu0 %v286, 119
  %v311 = vpop.permute.xlu0 %310
  %v312 = vsel %vm90, %v311, 0.0
  %v314 = vsel %vm92, %v288, 0
  %316 = vmatprep.subr.mxu0 0.0
  %317 = vmatpush1.msra.mxu0 %v291
  %318 = vmatprep.subr.mxu0 0.0
  %319 = vmatpush1.msra.mxu0 %v294
  %320 = vmatprep.subr.mxu0 0.0
  %321 = vmatpush1.msra.mxu0 %v297
  %322 = vmatprep.subr.mxu0 0.0
  %323 = vmatpush1.msra.mxu0 %v300
  %324 = vmatprep.subr.mxu0 0.0
  %325 = vmatpush1.msra.mxu0 %v286
  %326 = vmatprep.subr.mxu0 0.0
  %327 = vmatpush1.msra.mxu0 %v303
  %328 = vmatprep.subr.mxu0 0.0
  %329 = vmatpush1.msra.mxu0 %v306
  %330 = vmatprep.subr.mxu0 0.0
  %331 = vmatpush1.msra.mxu0 %v309
  %332 = vmatprep.subr.mxu0 0.0
  %333 = vmatpush1.msra.mxu0 %v312
  %334 = vmatprep.subr.mxu0 0.0
  %335 = vmatpush1.msra.mxu0 0.0
  %336 = vmatprep.subr.mxu0 0.0
  %337 = vmatpush1.msra.mxu0 0.0
  %338 = vmatprep.subr.mxu0 0.0
  %339 = vmatpush1.msra.mxu0 0.0
  %340 = vmatprep.subr.mxu0 0.0
  %341 = vmatpush1.msra.mxu0 0.0
  %342 = vmatprep.subr.mxu0 0.0
  %343 = vmatpush1.msra.mxu0 0.0
  %344 = vmatprep.subr.mxu0 0.0
  %345 = vmatpush1.msra.mxu0 0.0
  %346 = vmatprep.subr.mxu0 0.0
  %347 = vmatpush1.msra.mxu0 0.0
  %348 = vmatprep.subr.mxu0 0.0
  %349 = vmatpush1.msra.mxu0 0.0
  %350 = vmatprep.subr.mxu0 0.0
  %351 = vmatpush1.msra.mxu0 0.0
  %352 = vmatprep.subr.mxu0 0.0
  %353 = vmatpush1.msra.mxu0 0.0
  %354 = vmatprep.subr.mxu0 0.0
  %355 = vmatpush1.msra.mxu0 0.0
  %356 = vmatprep.subr.mxu0 0.0
  %357 = vmatpush1.msra.mxu0 0.0
  %358 = vmatprep.subr.mxu0 0.0
  %359 = vmatpush1.msra.mxu0 0.0
  %360 = vmatprep.subr.mxu0 0.0
  %361 = vmatpush1.msra.mxu0 0.0
  %362 = vmatprep.subr.mxu0 0.0
  %363 = vmatpush1.msra.mxu0 0.0
  %364 = vmatprep.subr.mxu0 0.0
  %365 = vmatpush1.msra.mxu0 0.0
  %366 = vmatprep.subr.mxu0 0.0
  %367 = vmatpush1.msra.mxu0 0.0
  %368 = vmatprep.subr.mxu0 0.0
  %369 = vmatpush1.msra.mxu0 0.0
  %370 = vmatprep.subr.mxu0 0.0
  %371 = vmatpush1.msra.mxu0 0.0
  %372 = vmatprep.subr.mxu0 0.0
  %373 = vmatpush1.msra.mxu0 0.0
  %374 = vmatprep.subr.mxu0 0.0
  %375 = vmatpush1.msra.mxu0 0.0
  %376 = vmatprep.subr.mxu0 0.0
  %377 = vmatpush1.msra.mxu0 0.0
  %378 = vmatprep.subr.mxu0 0.0
  %379 = vmatpush1.msra.mxu0 0.0
  %380 = vmatprep.mubr.f32.mxu0 0.0
  %381 = vmatmul.mubr.f32.gmra.mrb[0].mxu0 %v314
  %v382 = vpop.f32.mrb[0].mxu0
  %v383 = vadd.f32 0.0, %v382
  %v384 = vpop.f32.mrb[0].mxu0
  %385 = vdwg.mxu0
  %v386 = vmax.f32 %v383, 0.0
  %387 = vset.pattern.permute.xlu0 72
  %388 = vperm.xlu0 %387, %v288
  %v389 = vpop.permute.xlu0 %388
  %v391 = vmul.f32 %v386, %v389
  %392 = vset.pattern.permute.xlu0 73
  %393 = vperm.xlu0 %392, %v288
  %v394 = vpop.permute.xlu0 %393
  %v396 = vadd.f32 %v391, %v394
  %398 = vrot.lane.b32.xlu0 %v396, 64
  %v399 = vpop.permute.xlu0 %398
  %v400 = vld [vmem:[%s3] sm:$0xff]
  %v401 = vld [vmem:[%s3 + $0x8] sm:$0xff]
  %v402 = vld [vmem:[%s3 + $0x10] sm:$0xff]
  %v403 = vld [vmem:[%s3 + $0x18] sm:$0xff]
  %v404 = vld [vmem:[%s3 + $0x20] sm:$0xff]
  %v405 = vld [vmem:[%s3 + $0x28] sm:$0xff]
  %v406 = vld [vmem:[%s3 + $0x30] sm:$0xff]
  %v407 = vld [vmem:[%s3 + $0x38] sm:$0xff]
  %v408 = vld [vmem:[%s3 + $0x40] sm:$0xff]
  %v409 = vld [vmem:[%s3 + $0x48] sm:$0xff]
  %v410 = vld [vmem:[%s3 + $0x50] sm:$0xff]
  %v411 = vld [vmem:[%s3 + $0x58] sm:$0xff]
  %v412 = vld [vmem:[%s3 + $0x60] sm:$0xff]
  %v413 = vld [vmem:[%s3 + $0x68] sm:$0xff]
  %v414 = vld [vmem:[%s3 + $0x70] sm:$0xff]
  %v415 = vld [vmem:[%s3 + $0x78] sm:$0xff]
  %vm416 = vcmask 523264
  %v417 = vsel %vm416, %v396, 0
  %v419 = vsel %vm416, %v399, 0
  %421 = vmatprep.subr.mxu0 %v401
  %422 = vmatpush1.msra.mxu0 %v400
  %423 = vmatprep.subr.mxu0 %v403
  %424 = vmatpush1.msra.mxu0 %v402
  %425 = vmatprep.subr.mxu0 %v405
  %426 = vmatpush1.msra.mxu0 %v404
  %427 = vmatprep.subr.mxu0 %v407
  %428 = vmatpush1.msra.mxu0 %v406
  %429 = vmatprep.subr.mxu0 %v409
  %430 = vmatpush1.msra.mxu0 %v408
  %431 = vmatprep.subr.mxu0 %v411
  %432 = vmatpush1.msra.mxu0 %v410
  %433 = vmatprep.subr.mxu0 %v413
  %434 = vmatpush1.msra.mxu0 %v412
  %435 = vmatprep.subr.mxu0 %v415
  %436 = vmatpush1.msra.mxu0 %v414
  %437 = vmatprep.subr.mxu0 0.0
  %438 = vmatpush1.msra.mxu0 0.0
  %439 = vmatprep.subr.mxu0 0.0
  %440 = vmatpush1.msra.mxu0 0.0
  %441 = vmatprep.subr.mxu0 0.0
  %442 = vmatpush1.msra.mxu0 0.0
  %443 = vmatprep.subr.mxu0 0.0
  %444 = vmatpush1.msra.mxu0 0.0
  %445 = vmatprep.subr.mxu0 0.0
  %446 = vmatpush1.msra.mxu0 0.0
  %447 = vmatprep.subr.mxu0 0.0
  %448 = vmatpush1.msra.mxu0 0.0
  %449 = vmatprep.subr.mxu0 0.0
  %450 = vmatpush1.msra.mxu0 0.0
  %451 = vmatprep.subr.mxu0 0.0
  %452 = vmatpush1.msra.mxu0 0.0
  %453 = vmatprep.subr.mxu0 0.0
  %454 = vmatpush1.msra.mxu0 0.0
  %455 = vmatprep.subr.mxu0 0.0
  %456 = vmatpush1.msra.mxu0 0.0
  %457 = vmatprep.subr.mxu0 0.0
  %458 = vmatpush1.msra.mxu0 0.0
  %459 = vmatprep.subr.mxu0 0.0
  %460 = vmatpush1.msra.mxu0 0.0
  %461 = vmatprep.subr.mxu0 0.0
  %462 = vmatpush1.msra.mxu0 0.0
  %463 = vmatprep.subr.mxu0 0.0
  %464 = vmatpush1.msra.mxu0 0.0
  %465 = vmatprep.subr.mxu0 0.0
  %466 = vmatpush1.msra.mxu0 0.0
  %467 = vmatprep.subr.mxu0 0.0
  %468 = vmatpush1.msra.mxu0 0.0
  %469 = vmatprep.subr.mxu0 0.0
  %470 = vmatpush1.msra.mxu0 0.0
  %471 = vmatprep.subr.mxu0 0.0
  %472 = vmatpush1.msra.mxu0 0.0
  %473 = vmatprep.subr.mxu0 0.0
  %474 = vmatpush1.msra.mxu0 0.0
  %475 = vmatprep.subr.mxu0 0.0
  %476 = vmatpush1.msra.mxu0 0.0
  %477 = vmatprep.subr.mxu0 0.0
  %478 = vmatpush1.msra.mxu0 0.0
  %479 = vmatprep.subr.mxu0 0.0
  %480 = vmatpush1.msra.mxu0 0.0
  %481 = vmatprep.subr.mxu0 0.0
  %482 = vmatpush1.msra.mxu0 0.0
  %483 = vmatprep.subr.mxu0 0.0
  %484 = vmatpush1.msra.mxu0 0.0
  %485 = vmatprep.mubr.f32.mxu0 0.0
  %486 = vmatmul.mubr.f32.gmra.mrb[0].mxu0 %v417
  %v487 = vpop.f32.mrb[0].mxu0
  %v488 = vadd.f32 0.0, %v487
  %v489 = vpop.f32.mrb[0].mxu0
  %v490 = vadd.f32 0.0, %v489
  %491 = vmatprep.mubr.f32.mxu0 0.0
  %492 = vmatmul.mubr.f32.gmra.mrb[0].mxu0 %v419
  %v493 = vpop.f32.mrb[0].mxu0
  %v494 = vadd.f32 0.0, %v493
  %v495 = vpop.f32.mrb[0].mxu0
  %v496 = vadd.f32 0.0, %v495
  %497 = vdwg.mxu0
  %v498 = vrot.slane %v488, 4
  %v499 = vrot.slane %v490, 4
  %v500 = vld [vmem:[%s1] sm:$0xff]
  %v501 = vld [vmem:[%s1 + $0x8] sm:$0xff]
  %v502 = vadd.f32 %v500, %v498
  %v503 = vadd.f32 %v501, %v499
  %v504 = vrot.slane %v494, 4
  %v505 = vrot.slane %v496, 4
  %s506 = scalar_lea.vmem %s1, 16
  %v507 = vld [vmem:[%s506] sm:$0xff]
  %v508 = vld [vmem:[%s506 + $0x8] sm:$0xff]
  %v509 = vadd.f32 %v507, %v504
  %v510 = vadd.f32 %v508, %v505
  %511 = vst [vmem:[%s5] sm:$0xff] %v502
  %512 = vst [vmem:[%s5 + $0x8] sm:$0xff] %v503
  %513 = vst [vmem:[%s5 + $0x10] sm:$0xff] %v509
  %514 = vst [vmem:[%s5 + $0x18] sm:$0xff] %v510
  // Predicated region
  $region22: #{up_triple_forward.1} parent=0 // pred_check
    _
  $region23: #{up_triple_forward.1} parent=0 // pred_check_branch
    %516 = sbr.rel (0) target = $region25
  $region24: #{up_triple_forward.1} parent=0 // pred_region
    _
  $region25: #{up_triple_forward.1} parent=0 // pred_fallthru
    _
  // Predicated region
  $region26: #{up_triple_forward.1} parent=0 // pred_check
    _
  $region27: #{up_triple_forward.1} parent=0 // pred_check_branch
    %518 = sbr.rel (0) target = $region29
  $region28: #{up_triple_forward.1} parent=0 // pred_region
    _
  $region29: #{up_triple_forward.1} parent=0 // pred_fallthru
    _

</llo_original>
